<compile_context>
chip_gen: v5e
topology: v5e:2x2
jax: 0.10.0
libtpu: 0.0.40
codegen_flags: <defaults>
</compile_context>

<pallas_src>
import jax
import jax.numpy as jnp
from jax.experimental import pallas as pl
from jax.experimental.pallas import tpu as pltpu

_LANE = 128
# Row-block candidates (multiples of 8).  2048 rows x 128 lanes x 4 B = 1 MiB
# per block -> comfortably inside scoped VMEM with double buffering on
# v5e/v6e/v7x while large enough to amortize the ~0.35 us per-grid-step cost.
_ROW_BLOCK_CANDIDATES = (2048, 1024, 512, 256, 128, 64, 32, 16, 8)


def _copy_kernel(x_ref, o_ref):
    # Pure identity on the current block; no layout shuffles, no compute units
    # beyond the DMA / load / store path.
    o_ref[...] = x_ref[...]


def empty_layer_forward(x):
    """Identity forward (PyTorch EmptyLayer) as a Pallas TPU copy kernel."""
    orig_shape = x.shape
    total = int(x.size)

    if total % _LANE == 0:
        # Lane-dense path: present the tensor as a (rows, 128) slab so both the
        # input and output BlockSpecs have a full-width 128-lane minor dim.
        rows = total // _LANE
        x2 = x.reshape(rows, _LANE)  # contiguous reshape: layout plumbing only

        if rows % 8 == 0:
            rb = 8
            for cand in _ROW_BLOCK_CANDIDATES:
                if rows % cand == 0:
                    rb = cand
                    break
        else:
            # block equal to the full array extent is always legal
            rb = rows

        grid = (rows // rb,)

        out2 = pl.pallas_call(
            _copy_kernel,
            out_shape=jax.ShapeDtypeStruct((rows, _LANE), x.dtype),
            grid=grid,
            in_specs=[pl.BlockSpec((rb, _LANE), lambda i: (i, 0))],
            out_specs=pl.BlockSpec((rb, _LANE), lambda i: (i, 0)),
            compiler_params=pltpu.CompilerParams(
                dimension_semantics=("parallel",)
            ),
        )(x2)
        return out2.reshape(orig_shape)

    # Fallback: element count not a multiple of 128 -> copy the whole array as
    # one block (last block dims equal the full array dims, which is legal).
    # TODO(synk): for very large non-128-divisible tensors this single block
    #             could exceed VMEM; a padded/tiled path would be needed there.
    ndim = x.ndim
    return pl.pallas_call(
        _copy_kernel,
        out_shape=jax.ShapeDtypeStruct(x.shape, x.dtype),
        grid=(1,),
        in_specs=[pl.BlockSpec(x.shape, lambda i: (0,) * ndim)],
        out_specs=pl.BlockSpec(x.shape, lambda i: (0,) * ndim),
        compiler_params=pltpu.CompilerParams(
            dimension_semantics=("arbitrary",)
        ),
    )(x)


if __name__ == "__main__":
    key = jax.random.PRNGKey(0)
    k1, k2, k3 = jax.random.split(key, 3)

    # Primary test shape (consistent with the module's conv-net usage): NCHW.
    x = jax.random.normal(k1, (2, 4, 16, 16), dtype=jnp.float32)
    out = jax.block_until_ready(empty_layer_forward(x))
    assert out.shape == x.shape and out.dtype == x.dtype
    assert jnp.array_equal(out, x), "identity mismatch (lane-dense path, tiny)"

    # Larger shape exercising a multi-step parallel grid (rows=8192 -> 4 blocks).
    x_big = jax.random.normal(k2, (4, 16, 64, 64), dtype=jnp.float32)
    out_big = jax.block_until_ready(empty_layer_forward(x_big))
    assert jnp.array_equal(out_big, x_big), "identity mismatch (multi-block path)"

    # Shape whose element count is NOT a multiple of 128 -> fallback path.
    x_odd = jax.random.normal(k3, (2, 3, 5, 7), dtype=jnp.float32)
    out_odd = jax.block_until_ready(empty_layer_forward(x_odd))
    assert jnp.array_equal(out_odd, x_odd), "identity mismatch (fallback path)"

    print("KERNEL_OK")
</pallas_src>

<mosaic_0001>
module attributes {stable_mosaic.version = 11 : i64} {
  func.func @_copy_kernel(%arg0: i32, %arg1: memref<16x128xf32, #tpu.memory_space<vmem>>, %arg2: memref<16x128xf32, #tpu.memory_space<vmem>>) attributes {dimension_semantics = [#tpu.dimension_semantics<parallel>], iteration_bounds = array<i64: 1>, scalar_prefetch = 0 : i64, scratch_operands = 0 : i64, tpu.core_type = #tpu.core_type<tc>, window_params = [{transform_indices = @transform_0, window_bounds = array<i64: 16, 128>}, {transform_indices = @transform_1, window_bounds = array<i64: 16, 128>}]} {
    %c0 = arith.constant 0 : index
    %c0_0 = arith.constant 0 : index
    %0 = vector.load %arg1[%c0, %c0_0] : memref<16x128xf32, #tpu.memory_space<vmem>>, vector<16x128xf32>
    %c0_1 = arith.constant 0 : index
    %c0_2 = arith.constant 0 : index
    %1 = vector.load %arg2[%c0_1, %c0_2] : memref<16x128xf32, #tpu.memory_space<vmem>>, vector<16x128xf32>
    tpu.vector_store %arg2[%c0_1, %c0_2], %0 {strides = array<i32>} : memref<16x128xf32, #tpu.memory_space<vmem>>, vector<16x128xf32>,
    return
  }
  func.func @transform_0(%arg0: i32) -> (i32, i32) {
    %c0_i32 = arith.constant 0 : i32
    %c0_i32_0 = arith.constant 0 : i32
    return %arg0, %c0_i32 : i32, i32
  }
  func.func @transform_1(%arg0: i32) -> (i32, i32) {
    %c0_i32 = arith.constant 0 : i32
    %c0_i32_0 = arith.constant 0 : i32
    return %arg0, %c0_i32 : i32, i32
  }
}

</mosaic_0001>

<llo_original>
// kernel: tpu_custom_call.1
$region0: #{tpu_custom_call.1}
  #allocation0 [shape = 'u32[]', space=smem, size = 0x4, offset = 0x4, fixed_abs, tag = 'smem constant byte address 0x4 - core index']
  #allocation1 [shape = 'u32[72,128]{1,0:T(1,128)}', space=vmem, size = 0x9000, scoped, tag = 'internal scratch']
  %s0 = inlined_call_operand.hbm [shape: f32[16,128], index: 0, kind: input, shape index: {}]
  %s1 = inlined_call_operand.hbm [shape: f32[16,128], index: 1, kind: output, shape index: {}]
  %s2 = sld [smem:[#allocation0]]
  $region18: #{tpu_custom_call.1} parent=0
    _
  %s4 = ssub.s32 1, %s2
  %s5 = scalar_select 0, %s4, %s2
  $region1: #{tpu_custom_call.1} parent=0
    #allocation2 [shape = 'u8[8192]{0}', space=vmem, size = 0x2000, scoped, tag = 'input window, operand 0, single buffered']
    #allocation3 [shape = 's32[1]{0}', space=sflag, size = 0x4, scoped, tag = 'scoped memory for tpu_custom_call.1']
    #allocation4 [shape = 's32[1]{0}', space=sflag, size = 0x4, scoped, tag = 'scoped memory for tpu_custom_call.1']
    #allocation5 [shape = 'u8[8192]{0}', space=vmem, size = 0x2000, scoped, tag = 'output window, operand 0, single buffered']
    %6 = vsyncpa [#allocation3], 0
    %7 = vsyncpa [#allocation4], 0
    // Predicated region
    $region2: #{tpu_custom_call.1} parent=1 // pred_check
      _
    $region3: #{tpu_custom_call.1} parent=1 // pred_check_branch
      %9 = sbr.rel (0) target = $region5
    $region4: #{tpu_custom_call.1} parent=1 // pred_region
      %11 = vsyncadd [#allocation3], 0
      %s12 = sshll.u32 %s0, 4
      %s13 = int_to_ptr.hbm [resolvable:$true] %s12
      %s14 = sshll.u32 [#allocation2], 4
      %s15 = int_to_ptr.vmem [resolvable:$true] %s14
      %20 = dma.hbm_to_vmem [thread:$0]  %s13, 256, %s15, [#allocation3], 128, 128, 8
    $region5: #{tpu_custom_call.1} parent=1 // pred_fallthru
      _
    // Predicated region
    $region6: #{tpu_custom_call.1} parent=1 // pred_check
      _
    $region7: #{tpu_custom_call.1} parent=1 // pred_check_branch
      %22 = sbr.rel (0) target = $region9
    $region8: #{tpu_custom_call.1} parent=1 // pred_region
      %24 = dma.done [#allocation3], 256
    $region9: #{tpu_custom_call.1} parent=1 // pred_fallthru
      _
    %v25 = vld [vmem:[#allocation2] sm:$0xff]
    %v26 = vld [vmem:[#allocation2 + $0x8] sm:$0xff]
    %27 = vst [vmem:[#allocation5] sm:$0xff] %v25
    %28 = vst [vmem:[#allocation5 + $0x8] sm:$0xff] %v26
    // Predicated region
    $region10: #{tpu_custom_call.1} parent=1 // pred_check
      _
    $region11: #{tpu_custom_call.1} parent=1 // pred_check_branch
      %30 = sbr.rel (0) target = $region13
    $region12: #{tpu_custom_call.1} parent=1 // pred_region
      %32 = vsyncadd [#allocation4], 0
      %s33 = sshll.u32 [#allocation5], 4
      %s34 = int_to_ptr.vmem [resolvable:$true] %s33
      %s35 = sshll.u32 %s1, 4
      %s36 = int_to_ptr.hbm [resolvable:$true] %s35
      %41 = dma.vmem_to_hbm [thread:$0]  %s34, 256, %s36, [#allocation4], 128, 128, 8
    $region13: #{tpu_custom_call.1} parent=1 // pred_fallthru
      _
    // Predicated region
    $region14: #{tpu_custom_call.1} parent=1 // pred_check
      _
    $region15: #{tpu_custom_call.1} parent=1 // pred_check_branch
      %43 = sbr.rel (0) target = $region17
    $region16: #{tpu_custom_call.1} parent=1 // pred_region
      %45 = dma.done [#allocation4], 256
    $region17: #{tpu_custom_call.1} parent=1 // pred_fallthru
      _
    %46 = vsyncpa [#allocation3], 1
    %47 = vsyncpa [#allocation4], 1

</llo_original>
